<compile_context>
chip_gen: v7x
topology: tpu7x:2x2x1
jax: 0.10.0
libtpu: 0.0.40
codegen_flags: <defaults>
</compile_context>

<pallas_src>
import jax
import jax.numpy as jnp
from jax import lax
from jax.experimental import pallas as pl
from jax.experimental.pallas import tpu as pltpu


def _pick_l_tile(L, C, itemsize, vmem_budget_bytes=8 << 20, max_tile=2048):
    """Lane-dense spatial tile bounded by a per-call VMEM budget.

    Budget models the double-buffered x-in + out blocks of the apply kernel:
    ~4 * C * tl * itemsize bytes.  Non-divisible L is handled by the caller via
    a cdiv grid and in-kernel tail masking.
    """
    cap = vmem_budget_bytes // max(1, 4 * C * itemsize)
    cap = min(int(cap), max_tile)
    if L <= cap:
        return L                      # single full-extent tile (always a legal block)
    cap128 = (cap // 128) * 128
    return max(128, cap128)           # multiple-of-128 tile; tail tile is masked


# ----------------- kernel 1: AdaptiveAvgPool2d(1) == mean over W*H (tiled) -----------------
def _make_pool_kernel(C, tl, fold, L, inv_l, need_mask):
    nchunks = tl // fold

    def pool_kernel(x_ref, o_ref, acc_ref):
        li = pl.program_id(1)

        @pl.when(li == 0)
        def _():
            acc_ref[...] = jnp.zeros_like(acc_ref)

        # Lane-shaped accumulation: VALU chunk adds, no per-tile cross-lane reduce.
        lane = (lax.broadcasted_iota(jnp.int32, (1, C, fold), 2)
                if need_mask else None)
        s = None
        for j in range(nchunks):
            c = x_ref[:, :, j * fold:(j + 1) * fold].astype(jnp.float32)  # (1, C, fold)
            if need_mask:
                c = jnp.where(li * tl + j * fold + lane < L, c, 0.0)
            s = c if s is None else s + c
        acc_ref[...] += s

        @pl.when(li == pl.num_programs(1) - 1)
        def _():
            # Single cross-lane reduce + 1-lane store, once per batch element.
            o_ref[...] = jnp.sum(acc_ref[...], axis=-1, keepdims=True) * inv_l

    return pool_kernel


# --- kernel 2 (fused): excite MLP (recomputed per step) + out = x * gate broadcast ---
def _make_fused_kernel(eps=1e-5):
    def fused_kernel(pT_ref, w1_ref, w2_ref, g1_ref, b1_ref, g2_ref, b2_ref,
                     x_ref, o_ref):
        b = pl.program_id(0)

        # Excite MLP on the tiny pooled matrix, channels on sublanes, all f32.
        # Recomputed each grid step: a few kFLOP on the MXU, hidden under the
        # x-tile DMA; keeps both grid axes "parallel" (no per-core state).
        pT = pT_ref[...]                                                  # (C, B)
        h = lax.dot_general(w1_ref[...], pT, (((1,), (0,)), ((), ())),
                            preferred_element_type=jnp.float32)          # (Cr, B)
        # BatchNorm2d, training-mode batch stats (biased variance); spatial is 1x1.
        m1 = jnp.mean(h, axis=1, keepdims=True)
        v1 = jnp.mean(jnp.square(h - m1), axis=1, keepdims=True)
        h = g1_ref[...] * (h - m1) * lax.rsqrt(v1 + eps) + b1_ref[...]
        h = jnp.maximum(h, 0.0)                                           # ReLU
        y = lax.dot_general(w2_ref[...], h, (((1,), (0,)), ((), ())),
                            preferred_element_type=jnp.float32)          # (C, B)
        m2 = jnp.mean(y, axis=1, keepdims=True)
        v2 = jnp.mean(jnp.square(y - m2), axis=1, keepdims=True)
        y = g2_ref[...] * (y - m2) * lax.rsqrt(v2 + eps) + b2_ref[...]
        gate = jnp.clip(y + 3.0, 0.0, 6.0) * (1.0 / 6.0)                  # hsigmoid, (C, B)

        # Select this batch's column with an iota mask (robust; no dynamic lane slice).
        lane = lax.broadcasted_iota(jnp.int32, gate.shape, 1)
        col = jnp.sum(jnp.where(lane == b, gate, 0.0), axis=1, keepdims=True)  # (C, 1)

        # Apply: lane-dense block multiply, broadcast the per-channel gate over L.
        o_ref[...] = (x_ref[...].astype(jnp.float32) * col[None]).astype(o_ref.dtype)

    return fused_kernel


def se_module_pallas(x, params):
    B, C, W, H = x.shape
    L = W * H
    Cr = params["w1"].shape[0]
    dtype = x.dtype
    itemsize = jnp.dtype(dtype).itemsize
    x3 = x.reshape(B, C, L)                     # free reshape: W*H already contiguous

    tl = _pick_l_tile(L, C, itemsize)
    nlt = pl.cdiv(L, tl)
    need_mask = (L % tl) != 0
    fold = 128 if (tl % 128 == 0) else tl       # lane-fold width of the pool accumulator

    # ---- 1) global average pool (f32 accumulation, native-dtype loads) ----
    pooled = pl.pallas_call(
        _make_pool_kernel(C, tl, fold, L, 1.0 / float(L), need_mask),
        out_shape=jax.ShapeDtypeStruct((B, C, 1), jnp.float32),
        grid=(B, nlt),
        in_specs=[pl.BlockSpec((1, C, tl), lambda b, l: (b, 0, l))],
        out_specs=pl.BlockSpec((1, C, 1), lambda b, l: (b, 0, 0)),
        scratch_shapes=[pltpu.VMEM((1, C, fold), jnp.float32)],
        compiler_params=pltpu.CompilerParams(
            dimension_semantics=("parallel", "arbitrary")),
        cost_estimate=pl.CostEstimate(
            flops=B * C * L, transcendentals=0,
            bytes_accessed=itemsize * B * C * L + 4 * B * C),
    )(x3)

    # Tiny wrapper-side transpose so channels sit on sublanes inside the fused kernel
    # (layout plumbing on a B*C-element array; negligible).
    pooled_T = pooled.reshape(B, C).T.astype(jnp.float32)                 # (C, B)

    f32 = jnp.float32
    # ---- 2) fused excite MLP + gated multiply (native-dtype in/out) ----
    out = pl.pallas_call(
        _make_fused_kernel(),
        out_shape=jax.ShapeDtypeStruct((B, C, L), dtype),
        grid=(B, nlt),
        in_specs=[
            pl.BlockSpec((C, B), lambda b, l: (0, 0)),     # pooled^T, resident
            pl.BlockSpec((Cr, C), lambda b, l: (0, 0)),    # w1, resident
            pl.BlockSpec((C, Cr), lambda b, l: (0, 0)),    # w2, resident
            pl.BlockSpec((Cr, 1), lambda b, l: (0, 0)),    # gamma1
            pl.BlockSpec((Cr, 1), lambda b, l: (0, 0)),    # beta1
            pl.BlockSpec((C, 1), lambda b, l: (0, 0)),     # gamma2
            pl.BlockSpec((C, 1), lambda b, l: (0, 0)),     # beta2
            pl.BlockSpec((1, C, tl), lambda b, l: (b, 0, l)),  # x tile
        ],
        out_specs=pl.BlockSpec((1, C, tl), lambda b, l: (b, 0, l)),
        compiler_params=pltpu.CompilerParams(
            dimension_semantics=("parallel", "parallel")),
        cost_estimate=pl.CostEstimate(
            flops=B * C * L + 4 * B * C * Cr * nlt, transcendentals=0,
            bytes_accessed=2 * itemsize * B * C * L + 4 * (B * C + 2 * C * Cr)),
    )(pooled_T,
      params["w1"].astype(f32),
      params["w2"].astype(f32),
      params["g1"].reshape(Cr, 1).astype(f32),
      params["b1"].reshape(Cr, 1).astype(f32),
      params["g2"].reshape(C, 1).astype(f32),
      params["b2"].reshape(C, 1).astype(f32),
      x3)

    return out.reshape(B, C, W, H)


# ------------------------- pure-JAX reference (sanity) -------------------------
def se_module_ref(x, params):
    eps = 1e-5
    xf = x.astype(jnp.float32)
    p = xf.mean(axis=(2, 3))                             # (B, C)
    h = p @ params["w1"].T                               # (B, Cr)
    m1 = h.mean(axis=0, keepdims=True)
    v1 = ((h - m1) ** 2).mean(axis=0, keepdims=True)
    h = params["g1"][None] * (h - m1) * lax.rsqrt(v1 + eps) + params["b1"][None]
    h = jnp.maximum(h, 0.0)
    y = h @ params["w2"].T                               # (B, C)
    m2 = y.mean(axis=0, keepdims=True)
    v2 = ((y - m2) ** 2).mean(axis=0, keepdims=True)
    y = params["g2"][None] * (y - m2) * lax.rsqrt(v2 + eps) + params["b2"][None]
    s = jnp.clip(y + 3.0, 0.0, 6.0) / 6.0
    return (xf * s[:, :, None, None]).astype(x.dtype)


# ------------------------------------ main ------------------------------------
if __name__ == "__main__":
    B, C, W, H, reduction = 2, 16, 16, 16, 4
    Cr = C // reduction

    key = jax.random.PRNGKey(0)
    ks = jax.random.split(key, 7)
    params = {
        "w1": 0.5 * jax.random.normal(ks[0], (Cr, C), jnp.float32),   # Conv2d(C, C//4, 1, bias=False)
        "w2": 0.5 * jax.random.normal(ks[1], (C, Cr), jnp.float32),   # Conv2d(C//4, C, 1, bias=False)
        "g1": 1.0 + 0.1 * jax.random.normal(ks[2], (Cr,), jnp.float32),
        "b1": 0.1 * jax.random.normal(ks[3], (Cr,), jnp.float32),
        "g2": 1.0 + 0.1 * jax.random.normal(ks[4], (C,), jnp.float32),
        "b2": 0.1 * jax.random.normal(ks[5], (C,), jnp.float32),
    }
    x = jax.random.normal(ks[6], (B, C, W, H), jnp.float32)

    out = jax.block_until_ready(se_module_pallas(x, params))
    ref = jax.block_until_ready(se_module_ref(x, params))

    assert out.shape == (B, C, W, H)
    assert out.dtype == x.dtype
    assert jnp.allclose(out, ref, rtol=1e-4, atol=1e-4), "mismatch vs reference"
    print("KERNEL_OK")
</pallas_src>

<mosaic_0001>
module attributes {stable_mosaic.version = 11 : i64} {
  func.func @pool_kernel(%arg0: i32, %arg1: i32, %arg2: memref<1x16x256xf32, #tpu.memory_space<vmem>>, %arg3: memref<1x16x1xf32, #tpu.memory_space<vmem>>, %arg4: memref<1x16x128xf32, #tpu.memory_space<vmem>>) attributes {dimension_semantics = [#tpu.dimension_semantics<parallel>, #tpu.dimension_semantics<arbitrary>], iteration_bounds = array<i64: 2, 1>, scalar_prefetch = 0 : i64, scratch_operands = 1 : i64, tpu.core_type = #tpu.core_type<tc>, window_params = [{transform_indices = @transform_0, window_bounds = array<i64: 1, 16, 256>}, {transform_indices = @transform_1, window_bounds = array<i64: 1, 16, 1>}]} {
    %c0_i32 = arith.constant 0 : i32
    %0 = arith.cmpi eq, %arg1, %c0_i32 : i32
    %1 = arith.extui %0 : i1 to i32
    %c0_i32_0 = arith.constant 0 : i32
    %2 = arith.cmpi ne, %1, %c0_i32_0 : i32
    scf.if %2 {
      %cst = arith.constant 0.000000e+00 : f32
      %12 = vector.broadcast %cst : f32 to vector<1x16x128xf32>
      %c0_13 = arith.constant 0 : index
      %c0_14 = arith.constant 0 : index
      %c0_15 = arith.constant 0 : index
      %13 = vector.load %arg4[%c0_13, %c0_14, %c0_15] : memref<1x16x128xf32, #tpu.memory_space<vmem>>, vector<1x16x128xf32>
      tpu.vector_store %arg4[%c0_13, %c0_14, %c0_15], %12 {strides = array<i32>} : memref<1x16x128xf32, #tpu.memory_space<vmem>>, vector<1x16x128xf32>,
    } else {
    }
    %c0 = arith.constant 0 : index
    %c0_1 = arith.constant 0 : index
    %c0_2 = arith.constant 0 : index
    %3 = vector.load %arg2[%c0, %c0_1, %c0_2] : memref<1x16x256xf32, #tpu.memory_space<vmem>>, vector<1x16x128xf32>
    %c0_3 = arith.constant 0 : index
    %c0_4 = arith.constant 0 : index
    %c128 = arith.constant 128 : index
    %4 = vector.load %arg2[%c0_3, %c0_4, %c128] : memref<1x16x256xf32, #tpu.memory_space<vmem>>, vector<1x16x128xf32>
    %5 = arith.addf %3, %4 : vector<1x16x128xf32>
    %c0_5 = arith.constant 0 : index
    %c0_6 = arith.constant 0 : index
    %c0_7 = arith.constant 0 : index
    %6 = vector.load %arg4[%c0_5, %c0_6, %c0_7] : memref<1x16x128xf32, #tpu.memory_space<vmem>>, vector<1x16x128xf32>
    %7 = arith.addf %6, %5 : vector<1x16x128xf32>
    %c0_8 = arith.constant 0 : index
    %c0_9 = arith.constant 0 : index
    %c0_10 = arith.constant 0 : index
    %8 = vector.load %arg4[%c0_8, %c0_9, %c0_10] : memref<1x16x128xf32, #tpu.memory_space<vmem>>, vector<1x16x128xf32>
    tpu.vector_store %arg4[%c0_8, %c0_9, %c0_10], %7 {strides = array<i32>} : memref<1x16x128xf32, #tpu.memory_space<vmem>>, vector<1x16x128xf32>,
    %c0_i32_11 = arith.constant 0 : i32
    %9 = arith.cmpi eq, %arg1, %c0_i32_11 : i32
    %10 = arith.extui %9 : i1 to i32
    %c0_i32_12 = arith.constant 0 : i32
    %11 = arith.cmpi ne, %10, %c0_i32_12 : i32
    scf.if %11 {
      %c0_13 = arith.constant 0 : index
      %c0_14 = arith.constant 0 : index
      %c0_15 = arith.constant 0 : index
      %12 = vector.load %arg4[%c0_13, %c0_14, %c0_15] : memref<1x16x128xf32, #tpu.memory_space<vmem>>, vector<1x16x128xf32>
      %cst = arith.constant dense<0.000000e+00> : vector<1x16xf32>
      %13 = vector.multi_reduction <add>, %12, %cst [2] : vector<1x16x128xf32> to vector<1x16xf32>
      %14 = vector.shape_cast %13 : vector<1x16xf32> to vector<1x16x1xf32>
      %cst_16 = arith.constant 3.906250e-03 : f32
      %15 = vector.broadcast %cst_16 : f32 to vector<1x16x1xf32>
      %16 = arith.mulf %14, %15 : vector<1x16x1xf32>
      %c0_17 = arith.constant 0 : index
      %c0_18 = arith.constant 0 : index
      %c0_19 = arith.constant 0 : index
      %17 = vector.load %arg3[%c0_17, %c0_18, %c0_19] : memref<1x16x1xf32, #tpu.memory_space<vmem>>, vector<1x16x1xf32>
      tpu.vector_store %arg3[%c0_17, %c0_18, %c0_19], %16 {strides = array<i32>} : memref<1x16x1xf32, #tpu.memory_space<vmem>>, vector<1x16x1xf32>,
    } else {
    }
    return
  }
  func.func @transform_0(%arg0: i32, %arg1: i32) -> (i32, i32, i32) {
    %c0_i32 = arith.constant 0 : i32
    %c0_i32_0 = arith.constant 0 : i32
    return %arg0, %c0_i32, %arg1 : i32, i32, i32
  }
  func.func @transform_1(%arg0: i32, %arg1: i32) -> (i32, i32, i32) {
    %c0_i32 = arith.constant 0 : i32
    %c0_i32_0 = arith.constant 0 : i32
    %c0_i32_1 = arith.constant 0 : i32
    return %arg0, %c0_i32, %c0_i32_0 : i32, i32, i32
  }
}

</mosaic_0001>

<llo_original>
// kernel: tpu_custom_call.1
$region0: #{tpu_custom_call.1}
  #allocation0 [shape = 'u32[]', space=smem, size = 0x4, offset = 0x4, fixed_abs, tag = 'smem constant byte address 0x4 - core index']
  #allocation1 [shape = 'u32[144,128]{1,0:T(1,128)}', space=vmem, size = 0x12000, scoped, tag = 'internal scratch']
  #allocation2 [shape = 'f32[1,16,128]{2,1,0:T(8,128)}', space=vmem, size = 0x2000, scoped, tag = 'scratch operand']
  %s0 = inlined_call_operand.hbm [shape: f32[2,16,256], index: 0, kind: input, shape index: {}]
  %s1 = inlined_call_operand.vmem [shape: f32[2,16,1], index: 1, kind: output, shape index: {}]
  %s2 = sld [smem:[#allocation0]]
  $region49: #{tpu_custom_call.1} parent=0
    _
  %s4 = ssub.s32 1, %s2
  %s5 = scalar_select 0, %s4, %s2
  $region1: #{tpu_custom_call.1} parent=0
    #allocation3 [shape = 'u8[32768]{0}', space=vmem, size = 0x8000, scoped, tag = 'input window, operand 0']
    #allocation4 [shape = 's32[2]{0}', space=sflag, size = 0x8, scoped, tag = 'scoped memory for tpu_custom_call.1']
    %6 = vsyncpa [#allocation4], 0
    %s7 = scalar_lea.sflag [#allocation4], 1
    %8 = vsyncpa %s7, 0
    loop: start=0, step=1, limit=4
    $region2: #{tpu_custom_call.1} parent=1 // loop_pre_header
      _
    $region3: #{tpu_custom_call.1} parent=1 // loop_header
      %s10 = sphi 0, %s14
      %p11 = scmp.ge.s32.totalorder %s10, 4
      %s17 = sphi 0, %s29
      %s18 = sphi 0, %s25
      %s19 = sphi 0, %s17
      %s20 = sphi 0, %s18
      %s21 = sphi 0, %s19
      %s22 = sphi 0, %s20
      %s34 = sphi 0, %s36
      %s37 = sphi 0, %s34
      %s38 = sphi 0, %s37
      %s54 = sphi 0, %s38
      %s60 = sphi 0, %s62
      %s63 = sphi 0, %s60
      %s64 = sphi 0, %s63
      %s80 = sphi 0, %s64
    $region4: #{tpu_custom_call.1} parent=1 // loop_header_branch
      %13 = sbr.rel (%p11) target = $region8
    $region5: #{tpu_custom_call.1} parent=1 // loop_body
      %s15 = ssub.s32 %s10, 1
      %s16 = ssub.s32 %s10, 2
      %s23 = sadd.s32 1, %s18
      %p24 = scmp.ge.s32.totalorder %s23, 1
      %s25 = scalar_select %p24, 0, %s23
      %s26 = sadd.s32 1, %s17
      %s27 = scalar_select %p24, %s26, %s17
      %p28 = scmp.ge.s32.totalorder %s27, 2
      %s29 = scalar_select %p28, 0, %s27
      %s30 = ssub.s32 %s17, %s29
      %s31 = ssub.s32 %s18, %s25
      %s32 = sor.u32 %s30, %s31
      %p33 = scmp.eq.s32.totalorder %s32, 0
      %s35 = sadd.s32 %s34, 1
      %s36 = scalar_select %p33, %s34, %s35
      %p39 = pneg %p33
      %p40 = scmp.eq.s32.totalorder %s10, 1
      %p41 = por %p39, %p40
      %p42 = scmp.ne.s32.totalorder %s34, %s37
      %p43 = scmp.eq.s32.totalorder %s10, 0
      %p44 = por %p42, %p43
      %p45 = scmp.ne.s32.totalorder %s34, %s37
      %p46 = scmp.eq.s32.totalorder %s15, 1
      %p47 = por %p45, %p46
      %p48 = scmp.ne.s32.totalorder %s37, %s38
      %p49 = scmp.eq.s32.totalorder %s15, 0
      %p50 = por %p48, %p49
      %p51 = scmp.ne.s32.totalorder %s37, %s38
      %p52 = scmp.eq.s32.totalorder %s16, 1
      %p53 = por %p51, %p52
      %p55 = scmp.ne.s32.totalorder %s38, %s54
      %p56 = scmp.eq.s32.totalorder %s16, 0
      %p57 = por %p55, %p56
      %s58 = ssub.s32 %s17, %s29
      %p59 = scmp.eq.s32.totalorder %s58, 0
      %s61 = sadd.s32 %s60, 1
      %s62 = scalar_select %p59, %s60, %s61
      %p65 = pneg %p59
      %p66 = scmp.eq.s32.totalorder %s10, 1
      %p67 = por %p65, %p66
      %p68 = scmp.ne.s32.totalorder %s60, %s63
      %p69 = scmp.eq.s32.totalorder %s10, 0
      %p70 = por %p68, %p69
      %p71 = scmp.ne.s32.totalorder %s60, %s63
      %p72 = scmp.eq.s32.totalorder %s15, 1
      %p73 = por %p71, %p72
      %p74 = scmp.ne.s32.totalorder %s63, %s64
      %p75 = scmp.eq.s32.totalorder %s15, 0
      %p76 = por %p74, %p75
      %p77 = scmp.ne.s32.totalorder %s63, %s64
      %p78 = scmp.eq.s32.totalorder %s16, 1
      %p79 = por %p77, %p78
      %p81 = scmp.ne.s32.totalorder %s64, %s80
      %p82 = scmp.eq.s32.totalorder %s16, 0
      %p83 = por %p81, %p82
      %p84 = scmp.le.s32.totalorder 1, %s10
      %p85 = scmp.lt.s32.totalorder %s10, 3
      %p86 = pnand %p84, %p85
      %p87 = pneg %p86
      // Predicated region
      $region9: #{tpu_custom_call.1} parent=5 // pred_check
        _
      $region10: #{tpu_custom_call.1} parent=5 // pred_check_branch
        %89 = sbr.rel (%p86) target = $region12
      $region11: #{tpu_custom_call.1} parent=5 // pred_region
        %s90 = ssub.s32 %s10, 1
      $region12: #{tpu_custom_call.1} parent=5 // pred_fallthru
        _
      %p91 = scmp.lt.s32.totalorder %s10, 2
      // Predicated region
      $region13: #{tpu_custom_call.1} parent=5 // pred_check
        %p92 = pneg %p91
      $region14: #{tpu_custom_call.1} parent=5 // pred_check_branch
        %94 = sbr.rel (%p92) target = $region16
      $region15: #{tpu_custom_call.1} parent=5 // pred_region
        // Predicated region
        $region17: #{tpu_custom_call.1} parent=15 // pred_check
          %p95 = pneg %p44
        $region18: #{tpu_custom_call.1} parent=15 // pred_check_branch
          %97 = sbr.rel (%p95) target = $region20
        $region19: #{tpu_custom_call.1} parent=15 // pred_region
          %s98 = sand.u32 %s34, 1
          %s99 = scalar_lea.sflag [#allocation4], %s98
          %s100 = sand.u32 %s34, 1
          %s101 = smul.addr %s100, 32
          %s102 = scalar_lea.vmem [#allocation3], %s101
          %s103 = smul.u32 2, %s18
          %s105 = ssub.s32 512, 512
          %106 = vsyncadd %s99, %s105
          %s107 = smul.addr %s17, 4
          %s108 = sadd.s32 %s103, %s107
          %s109 = smul.addr %s108, 128
          %s110 = scalar_lea.hbm %s0, %s109
          %s111 = sshll.u32 %s102, 4
          %s112 = int_to_ptr.vmem [resolvable:$true] %s111
          %117 = dma.hbm_to_vmem [thread:$0]  %s110, 512, %s112, %s99, 256, 256, 16
        $region20: #{tpu_custom_call.1} parent=15 // pred_fallthru
          _
      $region16: #{tpu_custom_call.1} parent=5 // pred_fallthru
        _
      %p118 = scmp.le.s32.totalorder 1, %s10
      %p119 = scmp.lt.s32.totalorder %s10, 3
      %p120 = pnand %p118, %p119
      %p121 = pneg %p120
      // Predicated region
      $region21: #{tpu_custom_call.1} parent=5 // pred_check
        _
      $region22: #{tpu_custom_call.1} parent=5 // pred_check_branch
        %123 = sbr.rel (%p120) target = $region24
      $region23: #{tpu_custom_call.1} parent=5 // pred_region
        %s124 = ssub.s32 %s10, 1
        %s125 = sand.u32 %s37, 1
        %s126 = scalar_lea.sflag [#allocation4], %s125
        %s127 = sand.u32 %s37, 1
        %s128 = smul.addr %s127, 32
        %s129 = scalar_lea.vmem [#allocation3], %s128
        // Predicated region
        $region25: #{tpu_custom_call.1} parent=23 // pred_check
          %p130 = pneg %p50
        $region26: #{tpu_custom_call.1} parent=23 // pred_check_branch
          %132 = sbr.rel (%p130) target = $region28
        $region27: #{tpu_custom_call.1} parent=23 // pred_region
          %133 = dma.done %s126, 512
        $region28: #{tpu_custom_call.1} parent=23 // pred_fallthru
          _
        %s134 = sand.u32 %s37, 1
        %s135 = scalar_lea.sflag [#allocation4], %s134
        %s136 = sand.u32 %s37, 1
        %s137 = smul.addr %s136, 32
        %s138 = scalar_lea.vmem [#allocation3], %s137
        %p139 = pneg %p50
        %p140 = pneg %p47
        %p141 = pneg %p76
        %p142 = pneg %p73
        %p143 = scmp.lt.s32.totalorder %s19, 1
        %s144 = scalar_select %p143, %s19, 1
        %s145 = smul.addr %s144, 2
        %s146 = smul.addr %s145, 8
        %s147 = scalar_lea.vmem %s1, %s146
        %s148 = smul.u32 2, %s20
        %p149 = scmp.lt.s32.totalorder %s19, 1
        %s150 = scalar_select %p149, %s19, 1
        %s151 = smul.addr %s150, 2
        %s152 = smul.addr %s151, 8
        %s153 = scalar_lea.vmem %s1, %s152
        %p154 = scmp.eq.s32.totalorder %s20, 0
        // Predicated region
        $region29: #{tpu_custom_call.1} parent=23 // pred_check
          %p155 = pneg %p154
        $region30: #{tpu_custom_call.1} parent=23 // pred_check_branch
          %157 = sbr.rel (%p155) target = $region32
        $region31: #{tpu_custom_call.1} parent=23 // pred_region
          %158 = vst [vmem:[#allocation2] sm:$0xff] 0.0
          %159 = vst [vmem:[#allocation2 + $0x8] sm:$0xff] 0.0
        $region32: #{tpu_custom_call.1} parent=23 // pred_fallthru
          _
        %v160 = vld [vmem:[%s129] sm:$0xff]
        %v161 = vld [vmem:[%s129 + $0x10] sm:$0xff]
        %v162 = vld [vmem:[%s129 + $0x8] sm:$0xff]
        %v163 = vld [vmem:[%s129 + $0x18] sm:$0xff]
        %v164 = vadd.f32 %v160, %v162
        %v165 = vadd.f32 %v161, %v163
        %v166 = vld [vmem:[#allocation2] sm:$0xff]
        %v167 = vld [vmem:[#allocation2 + $0x8] sm:$0xff]
        %v168 = vadd.f32 %v166, %v164
        %v169 = vadd.f32 %v167, %v165
        %170 = vst [vmem:[#allocation2] sm:$0xff] %v168
        %171 = vst [vmem:[#allocation2 + $0x8] sm:$0xff] %v169
        // Predicated region
        $region33: #{tpu_custom_call.1} parent=23 // pred_check
          %p172 = pneg %p154
        $region34: #{tpu_custom_call.1} parent=23 // pred_check_branch
          %174 = sbr.rel (%p172) target = $region36
        $region35: #{tpu_custom_call.1} parent=23 // pred_region
          %v175 = vld [vmem:[#allocation2] sm:$0xff]
          %v176 = vld [vmem:[#allocation2 + $0x8] sm:$0xff]
          %177 = vadd.xlane.f32.xlu0 %v175
          %v178 = vpop.xlane.xlu0 %177
          %179 = vadd.xlane.f32.xlu0 %v176
          %v180 = vpop.xlane.xlu0 %179
          %v181 = vmul.f32 %v178, 0.00390625
          %v182 = vmul.f32 %v180, 0.00390625
          %vm183 = vcmask 7168
          %184 = vst.msk [vmem:[%s153] sm:$0xff] %vm183, %v181
          %185 = vst.msk [vmem:[%s153 + $0x8] sm:$0xff] %vm183, %v182
        $region36: #{tpu_custom_call.1} parent=23 // pred_fallthru
          _
        %p186 = scmp.lt.s32.totalorder %s19, 1
        %s187 = scalar_select %p186, %s19, 1
        %s188 = smul.addr %s187, 2
        %s189 = smul.addr %s188, 8
        %s190 = scalar_lea.vmem %s1, %s189
        // Predicated region
        $region37: #{tpu_custom_call.1} parent=23 // pred_check
          %p191 = pneg %p73
        $region38: #{tpu_custom_call.1} parent=23 // pred_check_branch
          %193 = sbr.rel (%p191) target = $region40
        $region39: #{tpu_custom_call.1} parent=23 // pred_region
          _
        $region40: #{tpu_custom_call.1} parent=23 // pred_fallthru
          _
      $region24: #{tpu_custom_call.1} parent=5 // pred_fallthru
        _
      %p194 = scmp.le.s32.totalorder 2, %s10
      // Predicated region
      $region41: #{tpu_custom_call.1} parent=5 // pred_check
        %p195 = pneg %p194
      $region42: #{tpu_custom_call.1} parent=5 // pred_check_branch
        %197 = sbr.rel (%p195) target = $region44
      $region43: #{tpu_custom_call.1} parent=5 // pred_region
        %s198 = ssub.s32 %s10, 2
        // Predicated region
        $region45: #{tpu_custom_call.1} parent=43 // pred_check
          %p199 = pneg %p79
        $region46: #{tpu_custom_call.1} parent=43 // pred_check_branch
          %201 = sbr.rel (%p199) target = $region48
        $region47: #{tpu_custom_call.1} parent=43 // pred_region
          %p202 = scmp.lt.s32.totalorder %s21, 1
          %s203 = scalar_select %p202, %s21, 1
          %s204 = smul.addr %s203, 2
          %s205 = smul.addr %s204, 8
          %s206 = scalar_lea.vmem %s1, %s205
        $region48: #{tpu_custom_call.1} parent=43 // pred_fallthru
          _
      $region44: #{tpu_custom_call.1} parent=5 // pred_fallthru
        _
    $region6: #{tpu_custom_call.1} parent=1 // loop_footer
      %s14 = sadd.s32 1, %s10
    $region7: #{tpu_custom_call.1} parent=1 // loop_footer_branch
      %9 = sbr.rel target = $region3
    $region8: #{tpu_custom_call.1} parent=1 // loop_exit
      _
    %207 = vsyncpa [#allocation4], 1
    %s208 = scalar_lea.sflag [#allocation4], 1
    %209 = vsyncpa %s208, 1

</llo_original>
